<compile_context>
chip_gen: v7x
topology: tpu7x:2x2x1
jax: 0.10.0
libtpu: 0.0.40
codegen_flags: <defaults>
</compile_context>

<pallas_src>
import functools

import jax
import jax.numpy as jnp
from jax import lax
from jax.experimental import pallas as pl
from jax.experimental.pallas import tpu as pltpu


def _conv_stats_kernel(x_ref, w_ref, y_ref, stats_ref, *, TH, KH, KW, Wo):
    """Fused conv + partial BN statistics for one (batch, cout-tile, row-tile).

    x_ref:     (1, Hp, Wp, Cin)   full padded NHWC image of this batch element
    w_ref:     (KH*KW*Cin, TC)    im2col-folded weights for this Cout tile
    y_ref:     (1, TH*Wo, TC)     conv output tile (rows*cols flattened -> lane-dense)
    stats_ref: (1, 1, 2, TC)      per-tile [sum, sum-of-squares] over pixels
    """
    r = pl.program_id(2)
    Cin = x_ref.shape[3]

    # Halo'd row window: output rows [r*TH, r*TH+TH) need padded rows
    # [r*TH, r*TH + TH + KH - 1).
    row0 = pl.multiple_of(r * TH, TH)
    xwin = x_ref[0, pl.ds(row0, TH + KH - 1), :, :]          # (TH+KH-1, Wp, Cin)

    # Fold the KH*KW taps into the contraction axis -> single MXU matmul with
    # K = KH*KW*Cin (good for small Cin; avoids 9 separate K=Cin matmuls).
    # TODO(synk): for large Cin (>=128) tile Cin as a grid reduction axis with a
    # VMEM scratch accumulator instead of materializing the folded patches.
    cols = []
    for kh in range(KH):
        for kw in range(KW):
            cols.append(xwin[kh:kh + TH, kw:kw + Wo, :])     # (TH, Wo, Cin)
    patches = jnp.concatenate(cols, axis=-1)                 # (TH, Wo, KH*KW*Cin)
    patches = patches.reshape(TH * Wo, KH * KW * Cin)

    y = jnp.dot(patches, w_ref[...], preferred_element_type=jnp.float32)
    y_ref[0] = y.astype(y_ref.dtype)                         # (TH*Wo, TC)

    # Streaming BatchNorm: per-tile partial sums (cross-tile reduce in wrapper).
    s = jnp.sum(y, axis=0, keepdims=True)                    # (1, TC)
    ss = jnp.sum(y * y, axis=0, keepdims=True)               # (1, TC)
    stats_ref[0, 0] = jnp.concatenate([s, ss], axis=0)       # (2, TC)


def _bn_act_kernel(y_ref, scale_ref, shift_ref, o_ref, *, neg_slope):
    """Folded BatchNorm affine + LeakyReLU on one conv-output tile."""
    y = y_ref[0].astype(jnp.float32)                         # (TH*Wo, TC)
    z = y * scale_ref[...] + shift_ref[...]                  # broadcast (1, TC)
    o_ref[0] = jnp.where(z > 0, z, neg_slope * z).astype(o_ref.dtype)


def _pick_row_tile(Ho, Wo, requested=None, target_bytes=2 << 20):
    """Largest row tile TH dividing Ho whose flattened tile obeys (8,128) rules."""
    divisors = [d for d in range(1, Ho + 1) if Ho % d == 0]

    def legal(d):
        return d == Ho or (d * Wo) % 8 == 0

    if requested is not None and requested in divisors and legal(requested):
        return requested
    fitting = [d for d in divisors if legal(d) and d * Wo * 128 * 4 <= target_bytes]
    if fitting:
        return max(fitting)
    return min(d for d in divisors if legal(d))


def cnn_block_forward(x_nchw, w_oihw, gamma, beta, *,
                      padding=1, eps=1e-5, neg_slope=0.1, row_tile=None):
    """CNN_block(in_ch, out_ch, bn_act=True, kernel_size=3, padding=1) forward."""
    N, Cin, H, W = x_nchw.shape
    Cout, Cin_w, KH, KW = w_oihw.shape
    assert Cin == Cin_w
    Ho = H + 2 * padding - KH + 1
    Wo = W + 2 * padding - KW + 1

    f32 = jnp.float32
    # Lane-dense output channels (pad Cout to a multiple of 128).
    Cpad = ((Cout + 127) // 128) * 128
    TC = 128
    Ct = Cpad // TC

    TH = _pick_row_tile(Ho, Wo, requested=row_tile)
    R = Ho // TH
    M = TH * Wo
    Kc = KH * KW * Cin

    # Wrapper-side layout prep (single pad + transposes; accepted HBM cost).
    # TODO(synk): fuse the zero-padding / NCHW<->NHWC transposes into kernel DMAs
    # (pl.Element row-halo tiles + boundary pl.when) to drop the extra HBM trips
    # and to avoid keeping the full padded image resident for very large H*W.
    x_nhwc = jnp.transpose(x_nchw, (0, 2, 3, 1))
    xp = jnp.pad(x_nhwc, ((0, 0), (padding, padding), (padding, padding), (0, 0)))
    Hp, Wp = int(xp.shape[1]), int(xp.shape[2])

    # im2col-folded weight: (KH, KW, Cin, Cout) -> (KH*KW*Cin, Cpad), zero-padded
    # along Cout so MXU output lanes are dense.
    w = jnp.transpose(w_oihw, (2, 3, 1, 0)).reshape(Kc, Cout)
    w = jnp.pad(w, ((0, 0), (0, Cpad - Cout))).astype(x_nchw.dtype)

    grid = (N, Ct, R)
    par = ("parallel", "parallel", "parallel")
    cparams = pltpu.CompilerParams(
        dimension_semantics=par, vmem_limit_bytes=32 * 1024 * 1024)

    conv_flops = 2 * N * Ho * Wo * Kc * Cpad
    conv_bytes = (xp.size * xp.dtype.itemsize + w.size * w.dtype.itemsize
                  + N * Ho * Wo * Cpad * 4 + N * R * 2 * Cpad * 4)

    # -------- Pass 1: conv + per-tile BN partial statistics --------
    conv_kernel = functools.partial(_conv_stats_kernel, TH=TH, KH=KH, KW=KW, Wo=Wo)
    conv_flat, stats = pl.pallas_call(
        conv_kernel,
        out_shape=(jax.ShapeDtypeStruct((N, Ho * Wo, Cpad), f32),
                   jax.ShapeDtypeStruct((N, R, 2, Cpad), f32)),
        grid=grid,
        in_specs=[
            pl.BlockSpec((1, Hp, Wp, Cin), lambda n, c, r: (n, 0, 0, 0)),
            pl.BlockSpec((Kc, TC), lambda n, c, r: (0, c)),
        ],
        out_specs=(
            pl.BlockSpec((1, M, TC), lambda n, c, r: (n, r, c)),
            pl.BlockSpec((1, 1, 2, TC), lambda n, c, r: (n, r, 0, c)),
        ),
        compiler_params=cparams,
        cost_estimate=pl.CostEstimate(
            flops=conv_flops, transcendentals=0, bytes_accessed=conv_bytes),
    )(xp, w)

    # -------- Cross-tile BN reduction (tiny) + fold into scale/shift --------
    cnt = jnp.float32(N * Ho * Wo)
    totals = jnp.sum(stats, axis=(0, 1))                     # (2, Cpad)
    mean = totals[0] / cnt
    var = jnp.maximum(totals[1] / cnt - mean * mean, 0.0)    # biased var (train mode)
    inv = lax.rsqrt(var + eps)
    gamma_p = jnp.pad(gamma.astype(f32), (0, Cpad - Cout))
    beta_p = jnp.pad(beta.astype(f32), (0, Cpad - Cout))
    scale_vec = gamma_p * inv
    shift_vec = beta_p - mean * scale_vec
    scale = scale_vec.reshape(1, Cpad)
    shift = shift_vec.reshape(1, Cpad)

    # -------- Pass 2: normalize + LeakyReLU (in-place over conv buffer) --------
    bn_kernel = functools.partial(_bn_act_kernel, neg_slope=neg_slope)
    out_flat = pl.pallas_call(
        bn_kernel,
        out_shape=jax.ShapeDtypeStruct((N, Ho * Wo, Cpad), f32),
        grid=grid,
        in_specs=[
            pl.BlockSpec((1, M, TC), lambda n, c, r: (n, r, c)),
            pl.BlockSpec((1, TC), lambda n, c, r: (0, c)),
            pl.BlockSpec((1, TC), lambda n, c, r: (0, c)),
        ],
        out_specs=pl.BlockSpec((1, M, TC), lambda n, c, r: (n, r, c)),
        input_output_aliases={0: 0},
        compiler_params=cparams,
        cost_estimate=pl.CostEstimate(
            flops=3 * N * Ho * Wo * Cpad, transcendentals=0,
            bytes_accessed=2 * N * Ho * Wo * Cpad * 4),
    )(conv_flat, scale, shift)

    out_nhwc = out_flat.reshape(N, Ho, Wo, Cpad)[..., :Cout]
    return jnp.transpose(out_nhwc, (0, 3, 1, 2)).astype(x_nchw.dtype)


if __name__ == "__main__":
    key = jax.random.PRNGKey(0)
    k_x, k_w = jax.random.split(key)

    # Small shapes consistent with the module: kernel_size=3, stride=1, padding=1.
    N, Cin, H, W = 2, 4, 16, 16
    Cout, K = 8, 3

    x = jax.random.normal(k_x, (N, Cin, H, W), dtype=jnp.float32)
    # Conv2d weight (no bias, since bn_act=True); deterministic synthetic init.
    w = 0.1 * jax.random.normal(k_w, (Cout, Cin, K, K), dtype=jnp.float32)
    # BatchNorm2d default init: gamma=1, beta=0.
    gamma = jnp.ones((Cout,), jnp.float32)
    beta = jnp.zeros((Cout,), jnp.float32)

    # row_tile=8 -> grid (N=2, Ct=1, R=2): exercises the pipelined grid.
    out = cnn_block_forward(x, w, gamma, beta, row_tile=8)
    out = jax.block_until_ready(out)

    # Pure-JAX reference for validation.
    conv = jax.lax.conv_general_dilated(
        x, w, window_strides=(1, 1), padding=((1, 1), (1, 1)),
        dimension_numbers=("NCHW", "OIHW", "NCHW"))
    mean = conv.mean(axis=(0, 2, 3), keepdims=True)
    var = conv.var(axis=(0, 2, 3), keepdims=True)            # biased, like PyTorch BN fwd
    ref = (conv - mean) / jnp.sqrt(var + 1e-5)
    ref = ref * gamma.reshape(1, -1, 1, 1) + beta.reshape(1, -1, 1, 1)
    ref = jnp.where(ref > 0, ref, 0.1 * ref)

    assert out.shape == (N, Cout, H, W)
    assert jnp.allclose(out, ref, atol=1e-4, rtol=1e-4), \
        float(jnp.max(jnp.abs(out - ref)))

    print("KERNEL_OK")
</pallas_src>

<mosaic_0001>
module attributes {stable_mosaic.version = 11 : i64} {
  func.func @_conv_stats_kernel(%arg0: i32, %arg1: i32, %arg2: i32, %arg3: memref<1x18x18x4xf32, #tpu.memory_space<vmem>>, %arg4: memref<36x128xf32, #tpu.memory_space<vmem>>, %arg5: memref<1x128x128xf32, #tpu.memory_space<vmem>>, %arg6: memref<1x1x2x128xf32, #tpu.memory_space<vmem>>) attributes {dimension_semantics = [#tpu.dimension_semantics<parallel>, #tpu.dimension_semantics<parallel>, #tpu.dimension_semantics<parallel>], iteration_bounds = array<i64: 2, 1, 2>, scalar_prefetch = 0 : i64, scratch_operands = 0 : i64, tpu.core_type = #tpu.core_type<tc>, window_params = [{transform_indices = @transform_0, window_bounds = array<i64: 1, 18, 18, 4>}, {transform_indices = @transform_1, window_bounds = array<i64: 36, 128>}, {transform_indices = @transform_2, window_bounds = array<i64: 1, 128, 128>}, {transform_indices = @transform_3, window_bounds = array<i64: 1, 1, 2, 128>}]} {
    %c8_i32 = arith.constant 8 : i32
    %0 = arith.muli %arg2, %c8_i32 : i32
    %1 = tpu.assume_multiple %0, 8 : i32
    %c0 = arith.constant 0 : index
    %2 = arith.index_cast %1 : i32 to index
    %c0_0 = arith.constant 0 : index
    %c0_1 = arith.constant 0 : index
    %3 = vector.load %arg3[%c0, %2, %c0_0, %c0_1] : memref<1x18x18x4xf32, #tpu.memory_space<vmem>>, vector<1x10x18x4xf32>
    %4 = vector.shape_cast %3 : vector<1x10x18x4xf32> to vector<10x18x4xf32>
    %5 = vector.extract_strided_slice %4 {offsets = [0, 0, 0], sizes = [8, 16, 4], strides = [1, 1, 1]} : vector<10x18x4xf32> to vector<8x16x4xf32>
    %6 = vector.extract_strided_slice %4 {offsets = [0, 1, 0], sizes = [8, 16, 4], strides = [1, 1, 1]} : vector<10x18x4xf32> to vector<8x16x4xf32>
    %7 = vector.extract_strided_slice %4 {offsets = [0, 2, 0], sizes = [8, 16, 4], strides = [1, 1, 1]} : vector<10x18x4xf32> to vector<8x16x4xf32>
    %8 = vector.extract_strided_slice %4 {offsets = [1, 0, 0], sizes = [8, 16, 4], strides = [1, 1, 1]} : vector<10x18x4xf32> to vector<8x16x4xf32>
    %9 = vector.extract_strided_slice %4 {offsets = [1, 1, 0], sizes = [8, 16, 4], strides = [1, 1, 1]} : vector<10x18x4xf32> to vector<8x16x4xf32>
    %10 = vector.extract_strided_slice %4 {offsets = [1, 2, 0], sizes = [8, 16, 4], strides = [1, 1, 1]} : vector<10x18x4xf32> to vector<8x16x4xf32>
    %11 = vector.extract_strided_slice %4 {offsets = [2, 0, 0], sizes = [8, 16, 4], strides = [1, 1, 1]} : vector<10x18x4xf32> to vector<8x16x4xf32>
    %12 = vector.extract_strided_slice %4 {offsets = [2, 1, 0], sizes = [8, 16, 4], strides = [1, 1, 1]} : vector<10x18x4xf32> to vector<8x16x4xf32>
    %13 = vector.extract_strided_slice %4 {offsets = [2, 2, 0], sizes = [8, 16, 4], strides = [1, 1, 1]} : vector<10x18x4xf32> to vector<8x16x4xf32>
    %14 = tpu.concatenate %5, %6, %7, %8, %9, %10, %11, %12, %13 in 2 : vector<8x16x4xf32>, vector<8x16x4xf32>, vector<8x16x4xf32>, vector<8x16x4xf32>, vector<8x16x4xf32>, vector<8x16x4xf32>, vector<8x16x4xf32>, vector<8x16x4xf32>, vector<8x16x4xf32> -> vector<8x16x36xf32>
    %15 = vector.shape_cast %14 : vector<8x16x36xf32> to vector<128x36xf32>
    %c0_2 = arith.constant 0 : index
    %c0_3 = arith.constant 0 : index
    %16 = vector.load %arg4[%c0_2, %c0_3] : memref<36x128xf32, #tpu.memory_space<vmem>>, vector<36x128xf32>
    %cst = arith.constant dense<0.000000e+00> : vector<128x128xf32>
    %17 = tpu.matmul %15, %16, %cst {dimension_numbers = #tpu.dot_dimension_numbers<[1], [0], [0], [1], [0, 0, 1, 1], [], []>} : vector<128x36xf32>, vector<36x128xf32>, vector<128x128xf32> -> vector<128x128xf32>
    %c0_4 = arith.constant 0 : index
    %c0_5 = arith.constant 0 : index
    %c0_6 = arith.constant 0 : index
    %18 = vector.load %arg5[%c0_4, %c0_5, %c0_6] : memref<1x128x128xf32, #tpu.memory_space<vmem>>, vector<1x128x128xf32>
    %19 = vector.shape_cast %18 : vector<1x128x128xf32> to vector<128x128xf32>
    %20 = vector.shape_cast %17 : vector<128x128xf32> to vector<1x128x128xf32>
    tpu.vector_store %arg5[%c0_4, %c0_5, %c0_6], %20 {strides = array<i32>} : memref<1x128x128xf32, #tpu.memory_space<vmem>>, vector<1x128x128xf32>,
    %cst_7 = arith.constant dense<0.000000e+00> : vector<128xf32>
    %21 = vector.multi_reduction <add>, %17, %cst_7 [0] : vector<128x128xf32> to vector<128xf32>
    %22 = vector.shape_cast %21 : vector<128xf32> to vector<1x128xf32>
    %23 = arith.mulf %17, %17 : vector<128x128xf32>
    %cst_8 = arith.constant dense<0.000000e+00> : vector<128xf32>
    %24 = vector.multi_reduction <add>, %23, %cst_8 [0] : vector<128x128xf32> to vector<128xf32>
    %25 = vector.shape_cast %24 : vector<128xf32> to vector<1x128xf32>
    %26 = tpu.concatenate %22, %25 in 0 : vector<1x128xf32>, vector<1x128xf32> -> vector<2x128xf32>
    %c0_9 = arith.constant 0 : index
    %c0_10 = arith.constant 0 : index
    %c0_11 = arith.constant 0 : index
    %c0_12 = arith.constant 0 : index
    %27 = vector.load %arg6[%c0_9, %c0_10, %c0_11, %c0_12] : memref<1x1x2x128xf32, #tpu.memory_space<vmem>>, vector<1x1x2x128xf32>
    %28 = vector.shape_cast %27 : vector<1x1x2x128xf32> to vector<2x128xf32>
    %29 = vector.shape_cast %26 : vector<2x128xf32> to vector<1x1x2x128xf32>
    tpu.vector_store %arg6[%c0_9, %c0_10, %c0_11, %c0_12], %29 {strides = array<i32>} : memref<1x1x2x128xf32, #tpu.memory_space<vmem>>, vector<1x1x2x128xf32>,
    return
  }
  func.func @transform_0(%arg0: i32, %arg1: i32, %arg2: i32) -> (i32, i32, i32, i32) {
    %c0_i32 = arith.constant 0 : i32
    %c0_i32_0 = arith.constant 0 : i32
    %c0_i32_1 = arith.constant 0 : i32
    %c0_i32_2 = arith.constant 0 : i32
    return %arg0, %c0_i32, %c0_i32_0, %c0_i32_1 : i32, i32, i32, i32
  }
  func.func @transform_1(%arg0: i32, %arg1: i32, %arg2: i32) -> (i32, i32) {
    %c0_i32 = arith.constant 0 : i32
    %c0_i32_0 = arith.constant 0 : i32
    return %c0_i32, %arg1 : i32, i32
  }
  func.func @transform_2(%arg0: i32, %arg1: i32, %arg2: i32) -> (i32, i32, i32) {
    %c0_i32 = arith.constant 0 : i32
    return %arg0, %arg2, %arg1 : i32, i32, i32
  }
  func.func @transform_3(%arg0: i32, %arg1: i32, %arg2: i32) -> (i32, i32, i32, i32) {
    %c0_i32 = arith.constant 0 : i32
    %c0_i32_0 = arith.constant 0 : i32
    return %arg0, %arg2, %c0_i32, %arg1 : i32, i32, i32, i32
  }
}

</mosaic_0001>

<llo_original>
// kernel: tpu_custom_call.1
$region0: #{tpu_custom_call.1}
  #allocation0 [shape = 'u32[]', space=smem, size = 0x4, offset = 0x4, fixed_abs, tag = 'smem constant byte address 0x4 - core index']
  #allocation1 [shape = 'u32[144,128]{1,0:T(1,128)}', space=vmem, size = 0x12000, scoped, tag = 'internal scratch']
  %s0 = inlined_call_operand.vmem [shape: f32[2,18,18,4], index: 0, kind: input, shape index: {}]
  %s1 = inlined_call_operand.vmem [shape: f32[36,128], index: 1, kind: input, shape index: {}]
  %s2 = inlined_call_operand.hbm [shape: f32[2,256,128], index: 2, kind: output, shape index: {0}]
  %s3 = inlined_call_operand.hbm [shape: f32[2,2,2,128], index: 3, kind: output, shape index: {1}]
  %4 = xla_tuple %s2, %s3
  %s5 = sld [smem:[#allocation0]]
  $region49: #{tpu_custom_call.1} parent=0
    _
  %s7 = ssub.s32 1, %s5
  %s8 = scalar_select 0, %s7, %s5
  $region1: #{tpu_custom_call.1} parent=0
    #allocation2 [shape = 'u8[131072]{0}', space=vmem, size = 0x20000, scoped, tag = 'output window, operand 0']
    #allocation3 [shape = 's32[2]{0}', space=sflag, size = 0x8, scoped, tag = 'scoped memory for tpu_custom_call.1']
    #allocation4 [shape = 'u8[2048]{0}', space=vmem, size = 0x800, scoped, tag = 'output window, operand 1']
    #allocation5 [shape = 's32[2]{0}', space=sflag, size = 0x8, scoped, tag = 'scoped memory for tpu_custom_call.1']
    %9 = vsyncpa [#allocation3], 0
    %s10 = scalar_lea.sflag [#allocation3], 1
    %11 = vsyncpa %s10, 0
    %12 = vsyncpa [#allocation5], 0
    %s13 = scalar_lea.sflag [#allocation5], 1
    %14 = vsyncpa %s13, 0
    loop: start=0, step=1, limit=6
    $region2: #{tpu_custom_call.1} parent=1 // loop_pre_header
      _
    $region3: #{tpu_custom_call.1} parent=1 // loop_header
      %s16 = sphi 0, %s20
      %p17 = scmp.ge.s32.totalorder %s16, 6
      %s23 = sphi 0, %s42
      %s24 = sphi 0, %s38
      %s25 = sphi 0, %s34
      %s26 = sphi 0, %s23
      %s27 = sphi 0, %s24
      %s28 = sphi 0, %s25
      %s29 = sphi 0, %s26
      %s30 = sphi 0, %s27
      %s31 = sphi 0, %s28
      %s45 = sphi 0, %s47
      %s48 = sphi 0, %s45
      %s49 = sphi 0, %s48
      %s65 = sphi 0, %s49
      %s71 = sphi 0, %s73
      %s74 = sphi 0, %s71
      %s75 = sphi 0, %s74
      %s91 = sphi 0, %s75
      %s101 = sphi 0, %s103
      %s104 = sphi 0, %s101
      %s105 = sphi 0, %s104
      %s121 = sphi 0, %s105
      %s131 = sphi 0, %s133
      %s134 = sphi 0, %s131
      %s135 = sphi 0, %s134
      %s151 = sphi 0, %s135
    $region4: #{tpu_custom_call.1} parent=1 // loop_header_branch
      %19 = sbr.rel (%p17) target = $region8
    $region5: #{tpu_custom_call.1} parent=1 // loop_body
      %s21 = ssub.s32 %s16, 1
      %s22 = ssub.s32 %s16, 2
      %s32 = sadd.s32 1, %s25
      %p33 = scmp.ge.s32.totalorder %s32, 2
      %s34 = scalar_select %p33, 0, %s32
      %s35 = sadd.s32 1, %s24
      %s36 = scalar_select %p33, %s35, %s24
      %p37 = scmp.ge.s32.totalorder %s36, 1
      %s38 = scalar_select %p37, 0, %s36
      %s39 = sadd.s32 1, %s23
      %s40 = scalar_select %p37, %s39, %s23
      %p41 = scmp.ge.s32.totalorder %s40, 2
      %s42 = scalar_select %p41, 0, %s40
      %s43 = ssub.s32 %s23, %s42
      %p44 = scmp.eq.s32.totalorder %s43, 0
      %s46 = sadd.s32 %s45, 1
      %s47 = scalar_select %p44, %s45, %s46
      %p50 = pneg %p44
      %p51 = scmp.eq.s32.totalorder %s16, 3
      %p52 = por %p50, %p51
      %p53 = scmp.ne.s32.totalorder %s45, %s48
      %p54 = scmp.eq.s32.totalorder %s16, 0
      %p55 = por %p53, %p54
      %p56 = scmp.ne.s32.totalorder %s45, %s48
      %p57 = scmp.eq.s32.totalorder %s21, 3
      %p58 = por %p56, %p57
      %p59 = scmp.ne.s32.totalorder %s48, %s49
      %p60 = scmp.eq.s32.totalorder %s21, 0
      %p61 = por %p59, %p60
      %p62 = scmp.ne.s32.totalorder %s48, %s49
      %p63 = scmp.eq.s32.totalorder %s22, 3
      %p64 = por %p62, %p63
      %p66 = scmp.ne.s32.totalorder %s49, %s65
      %p67 = scmp.eq.s32.totalorder %s22, 0
      %p68 = por %p66, %p67
      %s69 = ssub.s32 %s24, %s38
      %p70 = scmp.eq.s32.totalorder %s69, 0
      %s72 = sadd.s32 %s71, 1
      %s73 = scalar_select %p70, %s71, %s72
      %p76 = pneg %p70
      %p77 = scmp.eq.s32.totalorder %s16, 3
      %p78 = por %p76, %p77
      %p79 = scmp.ne.s32.totalorder %s71, %s74
      %p80 = scmp.eq.s32.totalorder %s16, 0
      %p81 = por %p79, %p80
      %p82 = scmp.ne.s32.totalorder %s71, %s74
      %p83 = scmp.eq.s32.totalorder %s21, 3
      %p84 = por %p82, %p83
      %p85 = scmp.ne.s32.totalorder %s74, %s75
      %p86 = scmp.eq.s32.totalorder %s21, 0
      %p87 = por %p85, %p86
      %p88 = scmp.ne.s32.totalorder %s74, %s75
      %p89 = scmp.eq.s32.totalorder %s22, 3
      %p90 = por %p88, %p89
      %p92 = scmp.ne.s32.totalorder %s75, %s91
      %p93 = scmp.eq.s32.totalorder %s22, 0
      %p94 = por %p92, %p93
      %s95 = ssub.s32 %s23, %s42
      %s96 = ssub.s32 %s25, %s34
      %s97 = sor.u32 %s95, %s96
      %s98 = ssub.s32 %s24, %s38
      %s99 = sor.u32 %s97, %s98
      %p100 = scmp.eq.s32.totalorder %s99, 0
      %s102 = sadd.s32 %s101, 1
      %s103 = scalar_select %p100, %s101, %s102
      %p106 = pneg %p100
      %p107 = scmp.eq.s32.totalorder %s16, 3
      %p108 = por %p106, %p107
      %p109 = scmp.ne.s32.totalorder %s101, %s104
      %p110 = scmp.eq.s32.totalorder %s16, 0
      %p111 = por %p109, %p110
      %p112 = scmp.ne.s32.totalorder %s101, %s104
      %p113 = scmp.eq.s32.totalorder %s21, 3
      %p114 = por %p112, %p113
      %p115 = scmp.ne.s32.totalorder %s104, %s105
      %p116 = scmp.eq.s32.totalorder %s21, 0
      %p117 = por %p115, %p116
      %p118 = scmp.ne.s32.totalorder %s104, %s105
      %p119 = scmp.eq.s32.totalorder %s22, 3
      %p120 = por %p118, %p119
      %p122 = scmp.ne.s32.totalorder %s105, %s121
      %p123 = scmp.eq.s32.totalorder %s22, 0
      %p124 = por %p122, %p123
      %s125 = ssub.s32 %s23, %s42
      %s126 = ssub.s32 %s25, %s34
      %s127 = sor.u32 %s125, %s126
      %s128 = ssub.s32 %s24, %s38
      %s129 = sor.u32 %s127, %s128
      %p130 = scmp.eq.s32.totalorder %s129, 0
      %s132 = sadd.s32 %s131, 1
      %s133 = scalar_select %p130, %s131, %s132
      %p136 = pneg %p130
      %p137 = scmp.eq.s32.totalorder %s16, 3
      %p138 = por %p136, %p137
      %p139 = scmp.ne.s32.totalorder %s131, %s134
      %p140 = scmp.eq.s32.totalorder %s16, 0
      %p141 = por %p139, %p140
      %p142 = scmp.ne.s32.totalorder %s131, %s134
      %p143 = scmp.eq.s32.totalorder %s21, 3
      %p144 = por %p142, %p143
      %p145 = scmp.ne.s32.totalorder %s134, %s135
      %p146 = scmp.eq.s32.totalorder %s21, 0
      %p147 = por %p145, %p146
      %p148 = scmp.ne.s32.totalorder %s134, %s135
      %p149 = scmp.eq.s32.totalorder %s22, 3
      %p150 = por %p148, %p149
      %p152 = scmp.ne.s32.totalorder %s135, %s151
      %p153 = scmp.eq.s32.totalorder %s22, 0
      %p154 = por %p152, %p153
      %p155 = scmp.le.s32.totalorder 1, %s16
      %p156 = scmp.lt.s32.totalorder %s16, 5
      %p157 = pnand %p155, %p156
      %p158 = pneg %p157
      // Predicated region
      $region9: #{tpu_custom_call.1} parent=5 // pred_check
        _
      $region10: #{tpu_custom_call.1} parent=5 // pred_check_branch
        %160 = sbr.rel (%p157) target = $region12
      $region11: #{tpu_custom_call.1} parent=5 // pred_region
        %s161 = ssub.s32 %s16, 1
        // Predicated region
        $region13: #{tpu_custom_call.1} parent=11 // pred_check
          %p162 = pneg %p87
        $region14: #{tpu_custom_call.1} parent=11 // pred_check_branch
          %164 = sbr.rel (%p162) target = $region16
        $region15: #{tpu_custom_call.1} parent=11 // pred_region
          %p165 = scmp.lt.s32.totalorder %s27, 0
          %s166 = scalar_select %p165, %s27, 0
          %s167 = smul.addr %s166, 8
          %s168 = scalar_lea.vmem %s1, %s167
        $region16: #{tpu_custom_call.1} parent=11 // pred_fallthru
          _
      $region12: #{tpu_custom_call.1} parent=5 // pred_fallthru
        _
      %p169 = scmp.lt.s32.totalorder %s16, 4
      // Predicated region
      $region17: #{tpu_custom_call.1} parent=5 // pred_check
        %p170 = pneg %p169
      $region18: #{tpu_custom_call.1} parent=5 // pred_check_branch
        %172 = sbr.rel (%p170) target = $region20
      $region19: #{tpu_custom_call.1} parent=5 // pred_region
        // Predicated region
        $region21: #{tpu_custom_call.1} parent=19 // pred_check
          %p173 = pneg %p55
        $region22: #{tpu_custom_call.1} parent=19 // pred_check_branch
          %175 = sbr.rel (%p173) target = $region24
        $region23: #{tpu_custom_call.1} parent=19 // pred_region
          %p176 = scmp.lt.s32.totalorder %s23, 1
          %s177 = scalar_select %p176, %s23, 1
          %s178 = smul.addr %s177, 54
          %s179 = smul.addr %s178, 8
          %s180 = scalar_lea.vmem %s0, %s179
        $region24: #{tpu_custom_call.1} parent=19 // pred_fallthru
          _
      $region20: #{tpu_custom_call.1} parent=5 // pred_fallthru
        _
      %p181 = scmp.le.s32.totalorder 1, %s16
      %p182 = scmp.lt.s32.totalorder %s16, 5
      %p183 = pnand %p181, %p182
      %p184 = pneg %p183
      // Predicated region
      $region25: #{tpu_custom_call.1} parent=5 // pred_check
        _
      $region26: #{tpu_custom_call.1} parent=5 // pred_check_branch
        %186 = sbr.rel (%p183) target = $region28
      $region27: #{tpu_custom_call.1} parent=5 // pred_region
        %s187 = ssub.s32 %s16, 1
        %p188 = scmp.lt.s32.totalorder %s26, 1
        %s189 = scalar_select %p188, %s26, 1
        %s190 = smul.addr %s189, 54
        %s191 = smul.addr %s190, 8
        %s192 = scalar_lea.vmem %s0, %s191
        %p193 = pneg %p61
        %p194 = pneg %p58
        %p195 = scmp.lt.s32.totalorder %s27, 0
        %s196 = scalar_select %p195, %s27, 0
        %s197 = smul.addr %s196, 8
        %s198 = scalar_lea.vmem %s1, %s197
        %p199 = pneg %p87
        %p200 = pneg %p84
        %p201 = pneg %p117
        %p202 = pneg %p114
        %s203 = sand.u32 %s104, 1
        %s204 = scalar_lea.sflag [#allocation3], %s203
        %s205 = sand.u32 %s104, 1
        %s206 = smul.addr %s205, 128
        %s207 = scalar_lea.vmem [#allocation2], %s206
        %p208 = pneg %p147
        %p209 = pneg %p144
        %s210 = sand.u32 %s134, 1
        %s211 = scalar_lea.sflag [#allocation5], %s210
        %s212 = sand.u32 %s134, 1
        %s213 = smul.addr %s212, 2
        %s214 = scalar_lea.vmem [#allocation4], %s213
        %p215 = scmp.lt.s32.totalorder %s26, 1
        %s216 = scalar_select %p215, %s26, 1
        %s217 = smul.addr %s216, 54
        %s218 = smul.addr %s217, 8
        %s219 = scalar_lea.vmem %s0, %s218
        %p220 = scmp.lt.s32.totalorder %s27, 0
        %s221 = scalar_select %p220, %s27, 0
        %s222 = smul.addr %s221, 8
        %s223 = scalar_lea.vmem %s1, %s222
        %s224 = smul.u32 16, %s28
        %s225 = smul.u32 %s28, 8
        %s226 = smul.u32 %s225, 24
        %s227 = scalar_lea.vmem %s219, %s226
        %v228 = vld [vmem:[%s227] sm:$0xff]
        %v229 = vld [vmem:[%s227 + $0x8] sm:$0xff]
        %v230 = vld [vmem:[%s227 + $0x10] sm:$0x3]
        %v231 = vld [vmem:[%s227 + $0x18] sm:$0xff]
        %v232 = vld [vmem:[%s227 + $0x20] sm:$0xff]
        %v233 = vld [vmem:[%s227 + $0x28] sm:$0x3]
        %v234 = vld [vmem:[%s227 + $0x30] sm:$0xff]
        %v235 = vld [vmem:[%s227 + $0x38] sm:$0xff]
        %v236 = vld [vmem:[%s227 + $0x40] sm:$0x3]
        %v237 = vld [vmem:[%s227 + $0x48] sm:$0xff]
        %v238 = vld [vmem:[%s227 + $0x50] sm:$0xff]
        %v239 = vld [vmem:[%s227 + $0x58] sm:$0x3]
        %v240 = vld [vmem:[%s227 + $0x60] sm:$0xff]
        %v241 = vld [vmem:[%s227 + $0x68] sm:$0xff]
        %v242 = vld [vmem:[%s227 + $0x70] sm:$0x3]
        %v243 = vld [vmem:[%s227 + $0x78] sm:$0xff]
        %v244 = vld [vmem:[%s227 + $0x80] sm:$0xff]
        %v245 = vld [vmem:[%s227 + $0x88] sm:$0x3]
        %v246 = vld [vmem:[%s227 + $0x90] sm:$0xff]
        %v247 = vld [vmem:[%s227 + $0x98] sm:$0xff]
        %v248 = vld [vmem:[%s227 + $0xa0] sm:$0x3]
        %v249 = vld [vmem:[%s227 + $0xa8] sm:$0xff]
        %v250 = vld [vmem:[%s227 + $0xb0] sm:$0xff]
        %v251 = vld [vmem:[%s227 + $0xb8] sm:$0x3]
        %v252 = vld [vmem:[%s227 + $0xc0] sm:$0xff]
        %v253 = vld [vmem:[%s227 + $0xc8] sm:$0xff]
        %v254 = vld [vmem:[%s227 + $0xd0] sm:$0x3]
        %v255 = vld [vmem:[%s227 + $0xd8] sm:$0xff]
        %v256 = vld [vmem:[%s227 + $0xe0] sm:$0xff]
        %v257 = vld [vmem:[%s227 + $0xe8] sm:$0x3]
        %vm282 = vcmask 1046528
        %v283 = vrot.slane %v228, 1
        %v284 = vrot.slane %v229, 1
        %v285 = vsel %vm282, %v283, %v284
        %v286 = vrot.slane %v230, 1
        %v287 = vsel %vm282, %v284, %v286
        %v288 = vrot.slane %v231, 1
        %v289 = vrot.slane %v232, 1
        %v290 = vsel %vm282, %v288, %v289
        %v291 = vrot.slane %v233, 1
        %v292 = vsel %vm282, %v289, %v291
        %v293 = vrot.slane %v234, 1
        %v294 = vrot.slane %v235, 1
        %v295 = vsel %vm282, %v293, %v294
        %v296 = vrot.slane %v236, 1
        %v297 = vsel %vm282, %v294, %v296
        %v298 = vrot.slane %v237, 1
        %v299 = vrot.slane %v238, 1
        %v300 = vsel %vm282, %v298, %v299
        %v301 = vrot.slane %v239, 1
        %v302 = vsel %vm282, %v299, %v301
        %v303 = vrot.slane %v240, 1
        %v304 = vrot.slane %v241, 1
        %v305 = vsel %vm282, %v303, %v304
        %v306 = vrot.slane %v242, 1
        %v307 = vsel %vm282, %v304, %v306
        %v308 = vrot.slane %v243, 1
        %v309 = vrot.slane %v244, 1
        %v310 = vsel %vm282, %v308, %v309
        %v311 = vrot.slane %v245, 1
        %v312 = vsel %vm282, %v309, %v311
        %v313 = vrot.slane %v246, 1
        %v314 = vrot.slane %v247, 1
        %v315 = vsel %vm282, %v313, %v314
        %v316 = vrot.slane %v248, 1
        %v317 = vsel %vm282, %v314, %v316
        %v318 = vrot.slane %v249, 1
        %v319 = vrot.slane %v250, 1
        %v320 = vsel %vm282, %v318, %v319
        %v321 = vrot.slane %v251, 1
        %v322 = vsel %vm282, %v319, %v321
        %323 = vrot.lane.b32.xlu0 %v285, 4
        %v324 = vpop.permute.xlu0 %323
        %325 = vrot.lane.b32.xlu0 %v287, 4
        %v326 = vpop.permute.xlu0 %325
        %327 = vrot.lane.b32.xlu0 %v290, 4
        %v328 = vpop.permute.xlu0 %327
        %329 = vrot.lane.b32.xlu0 %v292, 4
        %v330 = vpop.permute.xlu0 %329
        %331 = vrot.lane.b32.xlu0 %v295, 4
        %v332 = vpop.permute.xlu0 %331
        %333 = vrot.lane.b32.xlu0 %v297, 4
        %v334 = vpop.permute.xlu0 %333
        %335 = vrot.lane.b32.xlu0 %v300, 4
        %v336 = vpop.permute.xlu0 %335
        %337 = vrot.lane.b32.xlu0 %v302, 4
        %v338 = vpop.permute.xlu0 %337
        %339 = vrot.lane.b32.xlu0 %v305, 4
        %v340 = vpop.permute.xlu0 %339
        %341 = vrot.lane.b32.xlu0 %v307, 4
        %v342 = vpop.permute.xlu0 %341
        %343 = vrot.lane.b32.xlu0 %v310, 4
        %v344 = vpop.permute.xlu0 %343
        %345 = vrot.lane.b32.xlu0 %v312, 4
        %v346 = vpop.permute.xlu0 %345
        %347 = vrot.lane.b32.xlu0 %v315, 4
        %v348 = vpop.permute.xlu0 %347
        %349 = vrot.lane.b32.xlu0 %v317, 4
        %v350 = vpop.permute.xlu0 %349
        %351 = vrot.lane.b32.xlu0 %v320, 4
        %v352 = vpop.permute.xlu0 %351
        %353 = vrot.lane.b32.xlu0 %v322, 4
        %v354 = vpop.permute.xlu0 %353
        %vm371 = vcmask 1045504
        %v372 = vrot.slane %v228, 2
        %v373 = vrot.slane %v229, 2
        %v374 = vsel %vm371, %v372, %v373
        %v375 = vrot.slane %v230, 2
        %v376 = vsel %vm371, %v373, %v375
        %v377 = vrot.slane %v231, 2
        %v378 = vrot.slane %v232, 2
        %v379 = vsel %vm371, %v377, %v378
        %v380 = vrot.slane %v233, 2
        %v381 = vsel %vm371, %v378, %v380
        %v382 = vrot.slane %v234, 2
        %v383 = vrot.slane %v235, 2
        %v384 = vsel %vm371, %v382, %v383
        %v385 = vrot.slane %v236, 2
        %v386 = vsel %vm371, %v383, %v385
        %v387 = vrot.slane %v237, 2
        %v388 = vrot.slane %v238, 2
        %v389 = vsel %vm371, %v387, %v388
        %v390 = vrot.slane %v239, 2
        %v391 = vsel %vm371, %v388, %v390
        %v392 = vrot.slane %v240, 2
        %v393 = vrot.slane %v241, 2
        %v394 = vsel %vm371, %v392, %v393
        %v395 = vrot.slane %v242, 2
        %v396 = vsel %vm371, %v393, %v395
        %v397 = vrot.slane %v243, 2
        %v398 = vrot.slane %v244, 2
        %v399 = vsel %vm371, %v397, %v398
        %v400 = vrot.slane %v245, 2
        %v401 = vsel %vm371, %v398, %v400
        %v402 = vrot.slane %v246, 2
        %v403 = vrot.slane %v247, 2
        %v404 = vsel %vm371, %v402, %v403
        %v405 = vrot.slane %v248, 2
        %v406 = vsel %vm371, %v403, %v405
        %v407 = vrot.slane %v249, 2
        %v408 = vrot.slane %v250, 2
        %v409 = vsel %vm371, %v407, %v408
        %v410 = vrot.slane %v251, 2
        %v411 = vsel %vm371, %v408, %v410
        %412 = vrot.lane.b32.xlu0 %v374, 8
        %v413 = vpop.permute.xlu0 %412
        %414 = vrot.lane.b32.xlu0 %v376, 8
        %v415 = vpop.permute.xlu0 %414
        %416 = vrot.lane.b32.xlu0 %v379, 8
        %v417 = vpop.permute.xlu0 %416
        %418 = vrot.lane.b32.xlu0 %v381, 8
        %v419 = vpop.permute.xlu0 %418
        %420 = vrot.lane.b32.xlu0 %v384, 8
        %v421 = vpop.permute.xlu0 %420
        %422 = vrot.lane.b32.xlu0 %v386, 8
        %v423 = vpop.permute.xlu0 %422
        %424 = vrot.lane.b32.xlu0 %v389, 8
        %v425 = vpop.permute.xlu0 %424
        %426 = vrot.lane.b32.xlu0 %v391, 8
        %v427 = vpop.permute.xlu0 %426
        %428 = vrot.lane.b32.xlu0 %v394, 8
        %v429 = vpop.permute.xlu0 %428
        %430 = vrot.lane.b32.xlu0 %v396, 8
        %v431 = vpop.permute.xlu0 %430
        %432 = vrot.lane.b32.xlu0 %v399, 8
        %v433 = vpop.permute.xlu0 %432
        %434 = vrot.lane.b32.xlu0 %v401, 8
        %v435 = vpop.permute.xlu0 %434
        %436 = vrot.lane.b32.xlu0 %v404, 8
        %v437 = vpop.permute.xlu0 %436
        %438 = vrot.lane.b32.xlu0 %v406, 8
        %v439 = vpop.permute.xlu0 %438
        %440 = vrot.lane.b32.xlu0 %v409, 8
        %v441 = vpop.permute.xlu0 %440
        %442 = vrot.lane.b32.xlu0 %v411, 8
        %v443 = vpop.permute.xlu0 %442
        %462 = vrot.lane.b32.xlu0 %v231, 12
        %v463 = vpop.permute.xlu0 %462
        %464 = vrot.lane.b32.xlu0 %v232, 12
        %v465 = vpop.permute.xlu0 %464
        %466 = vrot.lane.b32.xlu0 %v234, 12
        %v467 = vpop.permute.xlu0 %466
        %468 = vrot.lane.b32.xlu0 %v235, 12
        %v469 = vpop.permute.xlu0 %468
        %470 = vrot.lane.b32.xlu0 %v237, 12
        %v471 = vpop.permute.xlu0 %470
        %472 = vrot.lane.b32.xlu0 %v238, 12
        %v473 = vpop.permute.xlu0 %472
        %474 = vrot.lane.b32.xlu0 %v240, 12
        %v475 = vpop.permute.xlu0 %474
        %476 = vrot.lane.b32.xlu0 %v241, 12
        %v477 = vpop.permute.xlu0 %476
        %478 = vrot.lane.b32.xlu0 %v243, 12
        %v479 = vpop.permute.xlu0 %478
        %480 = vrot.lane.b32.xlu0 %v244, 12
        %v481 = vpop.permute.xlu0 %480
        %482 = vrot.lane.b32.xlu0 %v246, 12
        %v483 = vpop.permute.xlu0 %482
        %484 = vrot.lane.b32.xlu0 %v247, 12
        %v485 = vpop.permute.xlu0 %484
        %486 = vrot.lane.b32.xlu0 %v249, 12
        %v487 = vpop.permute.xlu0 %486
        %488 = vrot.lane.b32.xlu0 %v250, 12
        %v489 = vpop.permute.xlu0 %488
        %490 = vrot.lane.b32.xlu0 %v252, 12
        %v491 = vpop.permute.xlu0 %490
        %492 = vrot.lane.b32.xlu0 %v253, 12
        %v493 = vpop.permute.xlu0 %492
        %v511 = vrot.slane %v252, 1
        %v512 = vrot.slane %v253, 1
        %v513 = vsel %vm282, %v511, %v512
        %v514 = vrot.slane %v254, 1
        %v515 = vsel %vm282, %v512, %v514
        %516 = vrot.lane.b32.xlu0 %v290, 16
        %v517 = vpop.permute.xlu0 %516
        %518 = vrot.lane.b32.xlu0 %v292, 16
        %v519 = vpop.permute.xlu0 %518
        %520 = vrot.lane.b32.xlu0 %v295, 16
        %v521 = vpop.permute.xlu0 %520
        %522 = vrot.lane.b32.xlu0 %v297, 16
        %v523 = vpop.permute.xlu0 %522
        %524 = vrot.lane.b32.xlu0 %v300, 16
        %v525 = vpop.permute.xlu0 %524
        %526 = vrot.lane.b32.xlu0 %v302, 16
        %v527 = vpop.permute.xlu0 %526
        %528 = vrot.lane.b32.xlu0 %v305, 16
        %v529 = vpop.permute.xlu0 %528
        %530 = vrot.lane.b32.xlu0 %v307, 16
        %v531 = vpop.permute.xlu0 %530
        %532 = vrot.lane.b32.xlu0 %v310, 16
        %v533 = vpop.permute.xlu0 %532
        %534 = vrot.lane.b32.xlu0 %v312, 16
        %v535 = vpop.permute.xlu0 %534
        %536 = vrot.lane.b32.xlu0 %v315, 16
        %v537 = vpop.permute.xlu0 %536
        %538 = vrot.lane.b32.xlu0 %v317, 16
        %v539 = vpop.permute.xlu0 %538
        %540 = vrot.lane.b32.xlu0 %v320, 16
        %v541 = vpop.permute.xlu0 %540
        %542 = vrot.lane.b32.xlu0 %v322, 16
        %v543 = vpop.permute.xlu0 %542
        %544 = vrot.lane.b32.xlu0 %v513, 16
        %v545 = vpop.permute.xlu0 %544
        %546 = vrot.lane.b32.xlu0 %v515, 16
        %v547 = vpop.permute.xlu0 %546
        %v564 = vrot.slane %v252, 2
        %v565 = vrot.slane %v253, 2
        %v566 = vsel %vm371, %v564, %v565
        %v567 = vrot.slane %v254, 2
        %v568 = vsel %vm371, %v565, %v567
        %569 = vrot.lane.b32.xlu0 %v379, 20
        %v570 = vpop.permute.xlu0 %569
        %571 = vrot.lane.b32.xlu0 %v381, 20
        %v572 = vpop.permute.xlu0 %571
        %573 = vrot.lane.b32.xlu0 %v384, 20
        %v574 = vpop.permute.xlu0 %573
        %575 = vrot.lane.b32.xlu0 %v386, 20
        %v576 = vpop.permute.xlu0 %575
        %577 = vrot.lane.b32.xlu0 %v389, 20
        %v578 = vpop.permute.xlu0 %577
        %579 = vrot.lane.b32.xlu0 %v391, 20
        %v580 = vpop.permute.xlu0 %579
        %581 = vrot.lane.b32.xlu0 %v394, 20
        %v582 = vpop.permute.xlu0 %581
        %583 = vrot.lane.b32.xlu0 %v396, 20
        %v584 = vpop.permute.xlu0 %583
        %585 = vrot.lane.b32.xlu0 %v399, 20
        %v586 = vpop.permute.xlu0 %585
        %587 = vrot.lane.b32.xlu0 %v401, 20
        %v588 = vpop.permute.xlu0 %587
        %589 = vrot.lane.b32.xlu0 %v404, 20
        %v590 = vpop.permute.xlu0 %589
        %591 = vrot.lane.b32.xlu0 %v406, 20
        %v592 = vpop.permute.xlu0 %591
        %593 = vrot.lane.b32.xlu0 %v409, 20
        %v594 = vpop.permute.xlu0 %593
        %595 = vrot.lane.b32.xlu0 %v411, 20
        %v596 = vpop.permute.xlu0 %595
        %597 = vrot.lane.b32.xlu0 %v566, 20
        %v598 = vpop.permute.xlu0 %597
        %599 = vrot.lane.b32.xlu0 %v568, 20
        %v600 = vpop.permute.xlu0 %599
        %619 = vrot.lane.b32.xlu0 %v234, 24
        %v620 = vpop.permute.xlu0 %619
        %621 = vrot.lane.b32.xlu0 %v235, 24
        %v622 = vpop.permute.xlu0 %621
        %623 = vrot.lane.b32.xlu0 %v237, 24
        %v624 = vpop.permute.xlu0 %623
        %625 = vrot.lane.b32.xlu0 %v238, 24
        %v626 = vpop.permute.xlu0 %625
        %627 = vrot.lane.b32.xlu0 %v240, 24
        %v628 = vpop.permute.xlu0 %627
        %629 = vrot.lane.b32.xlu0 %v241, 24
        %v630 = vpop.permute.xlu0 %629
        %631 = vrot.lane.b32.xlu0 %v243, 24
        %v632 = vpop.permute.xlu0 %631
        %633 = vrot.lane.b32.xlu0 %v244, 24
        %v634 = vpop.permute.xlu0 %633
        %635 = vrot.lane.b32.xlu0 %v246, 24
        %v636 = vpop.permute.xlu0 %635
        %637 = vrot.lane.b32.xlu0 %v247, 24
        %v638 = vpop.permute.xlu0 %637
        %639 = vrot.lane.b32.xlu0 %v249, 24
        %v640 = vpop.permute.xlu0 %639
        %641 = vrot.lane.b32.xlu0 %v250, 24
        %v642 = vpop.permute.xlu0 %641
        %643 = vrot.lane.b32.xlu0 %v252, 24
        %v644 = vpop.permute.xlu0 %643
        %645 = vrot.lane.b32.xlu0 %v253, 24
        %v646 = vpop.permute.xlu0 %645
        %647 = vrot.lane.b32.xlu0 %v255, 24
        %v648 = vpop.permute.xlu0 %647
        %649 = vrot.lane.b32.xlu0 %v256, 24
        %v650 = vpop.permute.xlu0 %649
        %v668 = vrot.slane %v255, 1
        %v669 = vrot.slane %v256, 1
        %v670 = vsel %vm282, %v668, %v669
        %v671 = vrot.slane %v257, 1
        %v672 = vsel %vm282, %v669, %v671
        %673 = vrot.lane.b32.xlu0 %v295, 28
        %v674 = vpop.permute.xlu0 %673
        %675 = vrot.lane.b32.xlu0 %v297, 28
        %v676 = vpop.permute.xlu0 %675
        %677 = vrot.lane.b32.xlu0 %v300, 28
        %v678 = vpop.permute.xlu0 %677
        %679 = vrot.lane.b32.xlu0 %v302, 28
        %v680 = vpop.permute.xlu0 %679
        %681 = vrot.lane.b32.xlu0 %v305, 28
        %v682 = vpop.permute.xlu0 %681
        %683 = vrot.lane.b32.xlu0 %v307, 28
        %v684 = vpop.permute.xlu0 %683
        %685 = vrot.lane.b32.xlu0 %v310, 28
        %v686 = vpop.permute.xlu0 %685
        %687 = vrot.lane.b32.xlu0 %v312, 28
        %v688 = vpop.permute.xlu0 %687
        %689 = vrot.lane.b32.xlu0 %v315, 28
        %v690 = vpop.permute.xlu0 %689
        %691 = vrot.lane.b32.xlu0 %v317, 28
        %v692 = vpop.permute.xlu0 %691
        %693 = vrot.lane.b32.xlu0 %v320, 28
        %v694 = vpop.permute.xlu0 %693
        %695 = vrot.lane.b32.xlu0 %v322, 28
        %v696 = vpop.permute.xlu0 %695
        %697 = vrot.lane.b32.xlu0 %v513, 28
        %v698 = vpop.permute.xlu0 %697
        %699 = vrot.lane.b32.xlu0 %v515, 28
        %v700 = vpop.permute.xlu0 %699
        %701 = vrot.lane.b32.xlu0 %v670, 28
        %v702 = vpop.permute.xlu0 %701
        %703 = vrot.lane.b32.xlu0 %v672, 28
        %v704 = vpop.permute.xlu0 %703
        %v721 = vrot.slane %v255, 2
        %v722 = vrot.slane %v256, 2
        %v723 = vsel %vm371, %v721, %v722
        %v724 = vrot.slane %v257, 2
        %v725 = vsel %vm371, %v722, %v724
        %726 = vrot.lane.b32.xlu0 %v384, 32
        %v727 = vpop.permute.xlu0 %726
        %728 = vrot.lane.b32.xlu0 %v386, 32
        %v729 = vpop.permute.xlu0 %728
        %730 = vrot.lane.b32.xlu0 %v389, 32
        %v731 = vpop.permute.xlu0 %730
        %732 = vrot.lane.b32.xlu0 %v391, 32
        %v733 = vpop.permute.xlu0 %732
        %734 = vrot.lane.b32.xlu0 %v394, 32
        %v735 = vpop.permute.xlu0 %734
        %736 = vrot.lane.b32.xlu0 %v396, 32
        %v737 = vpop.permute.xlu0 %736
        %738 = vrot.lane.b32.xlu0 %v399, 32
        %v739 = vpop.permute.xlu0 %738
        %740 = vrot.lane.b32.xlu0 %v401, 32
        %v741 = vpop.permute.xlu0 %740
        %742 = vrot.lane.b32.xlu0 %v404, 32
        %v743 = vpop.permute.xlu0 %742
        %744 = vrot.lane.b32.xlu0 %v406, 32
        %v745 = vpop.permute.xlu0 %744
        %746 = vrot.lane.b32.xlu0 %v409, 32
        %v747 = vpop.permute.xlu0 %746
        %748 = vrot.lane.b32.xlu0 %v411, 32
        %v749 = vpop.permute.xlu0 %748
        %750 = vrot.lane.b32.xlu0 %v566, 32
        %v751 = vpop.permute.xlu0 %750
        %752 = vrot.lane.b32.xlu0 %v568, 32
        %v753 = vpop.permute.xlu0 %752
        %754 = vrot.lane.b32.xlu0 %v723, 32
        %v755 = vpop.permute.xlu0 %754
        %756 = vrot.lane.b32.xlu0 %v725, 32
        %v757 = vpop.permute.xlu0 %756
        %vm774 = vcmask 31744
        %v775 = vsel %vm774, %v228, %v324
        %v776 = vsel %vm774, %v229, %v326
        %v777 = vsel %vm774, %v231, %v328
        %v778 = vsel %vm774, %v232, %v330
        %v779 = vsel %vm774, %v234, %v332
        %v780 = vsel %vm774, %v235, %v334
        %v781 = vsel %vm774, %v237, %v336
        %v782 = vsel %vm774, %v238, %v338
        %v783 = vsel %vm774, %v240, %v340
        %v784 = vsel %vm774, %v241, %v342
        %v785 = vsel %vm774, %v243, %v344
        %v786 = vsel %vm774, %v244, %v346
        %v787 = vsel %vm774, %v246, %v348
        %v788 = vsel %vm774, %v247, %v350
        %v789 = vsel %vm774, %v249, %v352
        %v790 = vsel %vm774, %v250, %v354
        %vm791 = vcmask 64512
        %v792 = vsel %vm791, %v775, %v413
        %v793 = vsel %vm791, %v776, %v415
        %v794 = vsel %vm791, %v777, %v417
        %v795 = vsel %vm791, %v778, %v419
        %v796 = vsel %vm791, %v779, %v421
        %v797 = vsel %vm791, %v780, %v423
        %v798 = vsel %vm791, %v781, %v425
        %v799 = vsel %vm791, %v782, %v427
        %v800 = vsel %vm791, %v783, %v429
        %v801 = vsel %vm791, %v784, %v431
        %v802 = vsel %vm791, %v785, %v433
        %v803 = vsel %vm791, %v786, %v435
        %v804 = vsel %vm791, %v787, %v437
        %v805 = vsel %vm791, %v788, %v439
        %v806 = vsel %vm791, %v789, %v441
        %v807 = vsel %vm791, %v790, %v443
        %vm808 = vcmask 97280
        %v809 = vsel %vm808, %v792, %v463
        %v810 = vsel %vm808, %v793, %v465
        %v811 = vsel %vm808, %v794, %v467
        %v812 = vsel %vm808, %v795, %v469
        %v813 = vsel %vm808, %v796, %v471
        %v814 = vsel %vm808, %v797, %v473
        %v815 = vsel %vm808, %v798, %v475
        %v816 = vsel %vm808, %v799, %v477
        %v817 = vsel %vm808, %v800, %v479
        %v818 = vsel %vm808, %v801, %v481
        %v819 = vsel %vm808, %v802, %v483
        %v820 = vsel %vm808, %v803, %v485
        %v821 = vsel %vm808, %v804, %v487
        %v822 = vsel %vm808, %v805, %v489
        %v823 = vsel %vm808, %v806, %v491
        %v824 = vsel %vm808, %v807, %v493
        %vm825 = vcmask 130048
        %v826 = vsel %vm825, %v809, %v517
        %v827 = vsel %vm825, %v810, %v519
        %v828 = vsel %vm825, %v811, %v521
        %v829 = vsel %vm825, %v812, %v523
        %v830 = vsel %vm825, %v813, %v525
        %v831 = vsel %vm825, %v814, %v527
        %v832 = vsel %vm825, %v815, %v529
        %v833 = vsel %vm825, %v816, %v531
        %v834 = vsel %vm825, %v817, %v533
        %v835 = vsel %vm825, %v818, %v535
        %v836 = vsel %vm825, %v819, %v537
        %v837 = vsel %vm825, %v820, %v539
        %v838 = vsel %vm825, %v821, %v541
        %v839 = vsel %vm825, %v822, %v543
        %v840 = vsel %vm825, %v823, %v545
        %v841 = vsel %vm825, %v824, %v547
        %vm842 = vcmask 162816
        %v843 = vsel %vm842, %v826, %v570
        %v844 = vsel %vm842, %v827, %v572
        %v845 = vsel %vm842, %v828, %v574
        %v846 = vsel %vm842, %v829, %v576
        %v847 = vsel %vm842, %v830, %v578
        %v848 = vsel %vm842, %v831, %v580
        %v849 = vsel %vm842, %v832, %v582
        %v850 = vsel %vm842, %v833, %v584
        %v851 = vsel %vm842, %v834, %v586
        %v852 = vsel %vm842, %v835, %v588
        %v853 = vsel %vm842, %v836, %v590
        %v854 = vsel %vm842, %v837, %v592
        %v855 = vsel %vm842, %v838, %v594
        %v856 = vsel %vm842, %v839, %v596
        %v857 = vsel %vm842, %v840, %v598
        %v858 = vsel %vm842, %v841, %v600
        %vm859 = vcmask 195584
        %v860 = vsel %vm859, %v843, %v620
        %v861 = vsel %vm859, %v844, %v622
        %v862 = vsel %vm859, %v845, %v624
        %v863 = vsel %vm859, %v846, %v626
        %v864 = vsel %vm859, %v847, %v628
        %v865 = vsel %vm859, %v848, %v630
        %v866 = vsel %vm859, %v849, %v632
        %v867 = vsel %vm859, %v850, %v634
        %v868 = vsel %vm859, %v851, %v636
        %v869 = vsel %vm859, %v852, %v638
        %v870 = vsel %vm859, %v853, %v640
        %v871 = vsel %vm859, %v854, %v642
        %v872 = vsel %vm859, %v855, %v644
        %v873 = vsel %vm859, %v856, %v646
        %v874 = vsel %vm859, %v857, %v648
        %v875 = vsel %vm859, %v858, %v650
        %vm876 = vcmask 228352
        %v877 = vsel %vm876, %v860, %v674
        %v878 = vsel %vm876, %v861, %v676
        %v879 = vsel %vm876, %v862, %v678
        %v880 = vsel %vm876, %v863, %v680
        %v881 = vsel %vm876, %v864, %v682
        %v882 = vsel %vm876, %v865, %v684
        %v883 = vsel %vm876, %v866, %v686
        %v884 = vsel %vm876, %v867, %v688
        %v885 = vsel %vm876, %v868, %v690
        %v886 = vsel %vm876, %v869, %v692
        %v887 = vsel %vm876, %v870, %v694
        %v888 = vsel %vm876, %v871, %v696
        %v889 = vsel %vm876, %v872, %v698
        %v890 = vsel %vm876, %v873, %v700
        %v891 = vsel %vm876, %v874, %v702
        %v892 = vsel %vm876, %v875, %v704
        %vm893 = vcmask 261120
        %v894 = vsel %vm893, %v877, %v727
        %v895 = vsel %vm893, %v878, %v729
        %v896 = vsel %vm893, %v879, %v731
        %v897 = vsel %vm893, %v880, %v733
        %v898 = vsel %vm893, %v881, %v735
        %v899 = vsel %vm893, %v882, %v737
        %v900 = vsel %vm893, %v883, %v739
        %v901 = vsel %vm893, %v884, %v741
        %v902 = vsel %vm893, %v885, %v743
        %v903 = vsel %vm893, %v886, %v745
        %v904 = vsel %vm893, %v887, %v747
        %v905 = vsel %vm893, %v888, %v749
        %v906 = vsel %vm893, %v889, %v751
        %v907 = vsel %vm893, %v890, %v753
        %v908 = vsel %vm893, %v891, %v755
        %v909 = vsel %vm893, %v892, %v757
        %v910 = vld [vmem:[%s223] sm:$0xff]
        %v911 = vld [vmem:[%s223 + $0x8] sm:$0xff]
        %v912 = vld [vmem:[%s223 + $0x10] sm:$0xff]
        %v913 = vld [vmem:[%s223 + $0x18] sm:$0xff]
        %v914 = vld [vmem:[%s223 + $0x20] sm:$0xf]
        %vm915 = vcmask 293888
        %v917 = vsel %vm915, %v894, 0
        %v920 = vsel %vm915, %v895, 0
        %v923 = vsel %vm915, %v896, 0
        %v926 = vsel %vm915, %v897, 0
        %v929 = vsel %vm915, %v898, 0
        %v932 = vsel %vm915, %v899, 0
        %v935 = vsel %vm915, %v900, 0
        %v938 = vsel %vm915, %v901, 0
        %v941 = vsel %vm915, %v902, 0
        %v944 = vsel %vm915, %v903, 0
        %v947 = vsel %vm915, %v904, 0
        %v950 = vsel %vm915, %v905, 0
        %v953 = vsel %vm915, %v906, 0
        %v956 = vsel %vm915, %v907, 0
        %v959 = vsel %vm915, %v908, 0
        %v962 = vsel %vm915, %v909, 0
        %vm964 = vcmask 1043456
        %v966 = vsel %vm964, %v914, 0
        %968 = vmatprep.subr.mxu0 0.0
        %969 = vmatpush1.msra.mxu0 %v910
        %970 = vmatprep.subr.mxu0 0.0
        %971 = vmatpush1.msra.mxu0 %v911
        %972 = vmatprep.subr.mxu0 0.0
        %973 = vmatpush1.msra.mxu0 %v912
        %974 = vmatprep.subr.mxu0 0.0
        %975 = vmatpush1.msra.mxu0 %v913
        %976 = vmatprep.subr.mxu0 0.0
        %977 = vmatpush1.msra.mxu0 %v966
        %978 = vmatprep.subr.mxu0 0.0
        %979 = vmatpush1.msra.mxu0 0.0
        %980 = vmatprep.subr.mxu0 0.0
        %981 = vmatpush1.msra.mxu0 0.0
        %982 = vmatprep.subr.mxu0 0.0
        %983 = vmatpush1.msra.mxu0 0.0
        %984 = vmatprep.subr.mxu0 0.0
        %985 = vmatpush1.msra.mxu0 0.0
        %986 = vmatprep.subr.mxu0 0.0
        %987 = vmatpush1.msra.mxu0 0.0
        %988 = vmatprep.subr.mxu0 0.0
        %989 = vmatpush1.msra.mxu0 0.0
        %990 = vmatprep.subr.mxu0 0.0
        %991 = vmatpush1.msra.mxu0 0.0
        %992 = vmatprep.subr.mxu0 0.0
        %993 = vmatpush1.msra.mxu0 0.0
        %994 = vmatprep.subr.mxu0 0.0
        %995 = vmatpush1.msra.mxu0 0.0
        %996 = vmatprep.subr.mxu0 0.0
        %997 = vmatpush1.msra.mxu0 0.0
        %998 = vmatprep.subr.mxu0 0.0
        %999 = vmatpush1.msra.mxu0 0.0
        %1000 = vmatprep.subr.mxu0 0.0
        %1001 = vmatpush1.msra.mxu0 0.0
        %1002 = vmatprep.subr.mxu0 0.0
        %1003 = vmatpush1.msra.mxu0 0.0
        %1004 = vmatprep.subr.mxu0 0.0
        %1005 = vmatpush1.msra.mxu0 0.0
        %1006 = vmatprep.subr.mxu0 0.0
        %1007 = vmatpush1.msra.mxu0 0.0
        %1008 = vmatprep.subr.mxu0 0.0
        %1009 = vmatpush1.msra.mxu0 0.0
        %1010 = vmatprep.subr.mxu0 0.0
        %1011 = vmatpush1.msra.mxu0 0.0
        %1012 = vmatprep.subr.mxu0 0.0
        %1013 = vmatpush1.msra.mxu0 0.0
        %1014 = vmatprep.subr.mxu0 0.0
        %1015 = vmatpush1.msra.mxu0 0.0
        %1016 = vmatprep.subr.mxu0 0.0
        %1017 = vmatpush1.msra.mxu0 0.0
        %1018 = vmatprep.subr.mxu0 0.0
        %1019 = vmatpush1.msra.mxu0 0.0
        %1020 = vmatprep.subr.mxu0 0.0
        %1021 = vmatpush1.msra.mxu0 0.0
        %1022 = vmatprep.subr.mxu0 0.0
        %1023 = vmatpush1.msra.mxu0 0.0
        %1024 = vmatprep.subr.mxu0 0.0
        %1025 = vmatpush1.msra.mxu0 0.0
        %1026 = vmatprep.subr.mxu0 0.0
        %1027 = vmatpush1.msra.mxu0 0.0
        %1028 = vmatprep.subr.mxu0 0.0
        %1029 = vmatpush1.msra.mxu0 0.0
        %1030 = vmatprep.subr.mxu0 0.0
        %1031 = vmatpush1.msra.mxu0 0.0
        %1032 = vmatprep.mubr.f32.mxu0 0.0
        %1033 = vmatmul.mubr.f32.gmra.mrb[0].mxu0 %v917
        %v1034 = vpop.f32.mrb[0].mxu0
        %v1035 = vadd.f32 0.0, %v1034
        %v1036 = vpop.f32.mrb[0].mxu0
        %1037 = vmatprep.mubr.f32.mxu0 0.0
        %1038 = vmatmul.mubr.f32.gmra.mrb[0].mxu0 %v920
        %v1039 = vpop.f32.mrb[0].mxu0
        %v1040 = vadd.f32 0.0, %v1039
        %v1041 = vpop.f32.mrb[0].mxu0
        %1042 = vmatprep.mubr.f32.mxu0 0.0
        %1043 = vmatmul.mubr.f32.gmra.mrb[0].mxu0 %v923
        %v1044 = vpop.f32.mrb[0].mxu0
        %v1045 = vadd.f32 0.0, %v1044
        %v1046 = vpop.f32.mrb[0].mxu0
        %1047 = vmatprep.mubr.f32.mxu0 0.0
        %1048 = vmatmul.mubr.f32.gmra.mrb[0].mxu0 %v926
        %v1049 = vpop.f32.mrb[0].mxu0
        %v1050 = vadd.f32 0.0, %v1049
        %v1051 = vpop.f32.mrb[0].mxu0
        %1052 = vmatprep.mubr.f32.mxu0 0.0
        %1053 = vmatmul.mubr.f32.gmra.mrb[0].mxu0 %v929
        %v1054 = vpop.f32.mrb[0].mxu0
        %v1055 = vadd.f32 0.0, %v1054
        %v1056 = vpop.f32.mrb[0].mxu0
        %1057 = vmatprep.mubr.f32.mxu0 0.0
        %1058 = vmatmul.mubr.f32.gmra.mrb[0].mxu0 %v932
        %v1059 = vpop.f32.mrb[0].mxu0
        %v1060 = vadd.f32 0.0, %v1059
        %v1061 = vpop.f32.mrb[0].mxu0
        %1062 = vmatprep.mubr.f32.mxu0 0.0
        %1063 = vmatmul.mubr.f32.gmra.mrb[0].mxu0 %v935
        %v1064 = vpop.f32.mrb[0].mxu0
        %v1065 = vadd.f32 0.0, %v1064
        %v1066 = vpop.f32.mrb[0].mxu0
        %1067 = vmatprep.mubr.f32.mxu0 0.0
        %1068 = vmatmul.mubr.f32.gmra.mrb[0].mxu0 %v938
        %v1069 = vpop.f32.mrb[0].mxu0
        %v1070 = vadd.f32 0.0, %v1069
        %v1071 = vpop.f32.mrb[0].mxu0
        %1072 = vmatprep.mubr.f32.mxu0 0.0
        %1073 = vmatmul.mubr.f32.gmra.mrb[0].mxu0 %v941
        %v1074 = vpop.f32.mrb[0].mxu0
        %v1075 = vadd.f32 0.0, %v1074
        %v1076 = vpop.f32.mrb[0].mxu0
        %1077 = vmatprep.mubr.f32.mxu0 0.0
        %1078 = vmatmul.mubr.f32.gmra.mrb[0].mxu0 %v944
        %v1079 = vpop.f32.mrb[0].mxu0
        %v1080 = vadd.f32 0.0, %v1079
        %v1081 = vpop.f32.mrb[0].mxu0
        %1082 = vmatprep.mubr.f32.mxu0 0.0
        %1083 = vmatmul.mubr.f32.gmra.mrb[0].mxu0 %v947
        %v1084 = vpop.f32.mrb[0].mxu0
        %v1085 = vadd.f32 0.0, %v1084
        %v1086 = vpop.f32.mrb[0].mxu0
        %1087 = vmatprep.mubr.f32.mxu0 0.0
        %1088 = vmatmul.mubr.f32.gmra.mrb[0].mxu0 %v950
        %v1089 = vpop.f32.mrb[0].mxu0
        %v1090 = vadd.f32 0.0, %v1089
        %v1091 = vpop.f32.mrb[0].mxu0
        %1092 = vmatprep.mubr.f32.mxu0 0.0
        %1093 = vmatmul.mubr.f32.gmra.mrb[0].mxu0 %v953
        %v1094 = vpop.f32.mrb[0].mxu0
        %v1095 = vadd.f32 0.0, %v1094
        %v1096 = vpop.f32.mrb[0].mxu0
        %1097 = vmatprep.mubr.f32.mxu0 0.0
        %1098 = vmatmul.mubr.f32.gmra.mrb[0].mxu0 %v956
        %v1099 = vpop.f32.mrb[0].mxu0
        %v1100 = vadd.f32 0.0, %v1099
        %v1101 = vpop.f32.mrb[0].mxu0
        %1102 = vmatprep.mubr.f32.mxu0 0.0
        %1103 = vmatmul.mubr.f32.gmra.mrb[0].mxu0 %v959
        %v1104 = vpop.f32.mrb[0].mxu0
        %v1105 = vadd.f32 0.0, %v1104
        %v1106 = vpop.f32.mrb[0].mxu0
        %1107 = vmatprep.mubr.f32.mxu0 0.0
        %1108 = vmatmul.mubr.f32.gmra.mrb[0].mxu0 %v962
        %v1109 = vpop.f32.mrb[0].mxu0
        %v1110 = vadd.f32 0.0, %v1109
        %v1111 = vpop.f32.mrb[0].mxu0
        %1112 = vdwg.mxu0
        %1113 = vst [vmem:[%s207] sm:$0xff] %v1035
        %1114 = vst [vmem:[%s207 + $0x8] sm:$0xff] %v1040
        %1115 = vst [vmem:[%s207 + $0x10] sm:$0xff] %v1045
        %1116 = vst [vmem:[%s207 + $0x18] sm:$0xff] %v1050
        %1117 = vst [vmem:[%s207 + $0x20] sm:$0xff] %v1055
        %1118 = vst [vmem:[%s207 + $0x28] sm:$0xff] %v1060
        %1119 = vst [vmem:[%s207 + $0x30] sm:$0xff] %v1065
        %1120 = vst [vmem:[%s207 + $0x38] sm:$0xff] %v1070
        %1121 = vst [vmem:[%s207 + $0x40] sm:$0xff] %v1075
        %1122 = vst [vmem:[%s207 + $0x48] sm:$0xff] %v1080
        %1123 = vst [vmem:[%s207 + $0x50] sm:$0xff] %v1085
        %1124 = vst [vmem:[%s207 + $0x58] sm:$0xff] %v1090
        %1125 = vst [vmem:[%s207 + $0x60] sm:$0xff] %v1095
        %1126 = vst [vmem:[%s207 + $0x68] sm:$0xff] %v1100
        %1127 = vst [vmem:[%s207 + $0x70] sm:$0xff] %v1105
        %1128 = vst [vmem:[%s207 + $0x78] sm:$0xff] %v1110
        %v1129 = vadd.f32 %v1035, %v1040
        %v1130 = vadd.f32 %v1129, %v1045
        %v1131 = vadd.f32 %v1130, %v1050
        %v1132 = vadd.f32 %v1131, %v1055
        %v1133 = vadd.f32 %v1132, %v1060
        %v1134 = vadd.f32 %v1133, %v1065
        %v1135 = vadd.f32 %v1134, %v1070
        %v1136 = vadd.f32 %v1135, %v1075
        %v1137 = vadd.f32 %v1136, %v1080
        %v1138 = vadd.f32 %v1137, %v1085
        %v1139 = vadd.f32 %v1138, %v1090
        %v1140 = vadd.f32 %v1139, %v1095
        %v1141 = vadd.f32 %v1140, %v1100
        %v1142 = vadd.f32 %v1141, %v1105
        %v1143 = vadd.f32 %v1142, %v1110
        %v1144 = vrot.slane %v1143, 4
        %v1145 = vadd.f32 %v1143, %v1144
        %v1146 = vrot.slane %v1145, 2
        %v1147 = vadd.f32 %v1145, %v1146
        %v1148 = vrot.slane %v1147, 1
        %v1149 = vadd.f32 %v1147, %v1148
        %v1150 = vmul.f32 %v1035, %v1035
        %v1151 = vmul.f32 %v1040, %v1040
        %v1152 = vmul.f32 %v1045, %v1045
        %v1153 = vmul.f32 %v1050, %v1050
        %v1154 = vmul.f32 %v1055, %v1055
        %v1155 = vmul.f32 %v1060, %v1060
        %v1156 = vmul.f32 %v1065, %v1065
        %v1157 = vmul.f32 %v1070, %v1070
        %v1158 = vmul.f32 %v1075, %v1075
        %v1159 = vmul.f32 %v1080, %v1080
        %v1160 = vmul.f32 %v1085, %v1085
        %v1161 = vmul.f32 %v1090, %v1090
        %v1162 = vmul.f32 %v1095, %v1095
        %v1163 = vmul.f32 %v1100, %v1100
        %v1164 = vmul.f32 %v1105, %v1105
        %v1165 = vmul.f32 %v1110, %v1110
        %v1166 = vadd.f32 %v1150, %v1151
        %v1167 = vadd.f32 %v1166, %v1152
        %v1168 = vadd.f32 %v1167, %v1153
        %v1169 = vadd.f32 %v1168, %v1154
        %v1170 = vadd.f32 %v1169, %v1155
        %v1171 = vadd.f32 %v1170, %v1156
        %v1172 = vadd.f32 %v1171, %v1157
        %v1173 = vadd.f32 %v1172, %v1158
        %v1174 = vadd.f32 %v1173, %v1159
        %v1175 = vadd.f32 %v1174, %v1160
        %v1176 = vadd.f32 %v1175, %v1161
        %v1177 = vadd.f32 %v1176, %v1162
        %v1178 = vadd.f32 %v1177, %v1163
        %v1179 = vadd.f32 %v1178, %v1164
        %v1180 = vadd.f32 %v1179, %v1165
        %v1181 = vrot.slane %v1180, 4
        %v1182 = vadd.f32 %v1180, %v1181
        %v1183 = vrot.slane %v1182, 2
        %v1184 = vadd.f32 %v1182, %v1183
        %v1185 = vrot.slane %v1184, 1
        %v1186 = vadd.f32 %v1184, %v1185
        %vm1187 = vcmask 1040384
        %v1188 = vsel %vm1187, %v1149, %v1186
        %1189 = vst [vmem:[%s214] sm:$0x3] %v1188
        %s1190 = sand.u32 %s104, 1
        %s1191 = scalar_lea.sflag [#allocation3], %s1190
        %s1192 = sand.u32 %s104, 1
        %s1193 = smul.addr %s1192, 128
        %s1194 = scalar_lea.vmem [#allocation2], %s1193
        %s1195 = sand.u32 %s134, 1
        %s1196 = scalar_lea.sflag [#allocation5], %s1195
        %s1197 = sand.u32 %s134, 1
        %s1198 = smul.addr %s1197, 2
        %s1199 = scalar_lea.vmem [#allocation4], %s1198
        // Predicated region
        $region29: #{tpu_custom_call.1} parent=27 // pred_check
          %p1200 = pneg %p114
        $region30: #{tpu_custom_call.1} parent=27 // pred_check_branch
          %1202 = sbr.rel (%p1200) target = $region32
        $region31: #{tpu_custom_call.1} parent=27 // pred_region
          %s1203 = smul.u32 16, %s28
          %s1205 = ssub.s32 2048, 2048
          %1206 = vsyncadd %s1191, %s1205
          %s1207 = sadd.s32 %s27, %s1203
          %s1208 = smul.addr %s26, 32
          %s1209 = sadd.s32 %s1207, %s1208
          %s1210 = smul.addr %s1209, 128
          %s1211 = scalar_lea.hbm %s2, %s1210
          %s1212 = sshll.u32 %s1194, 4
          %s1213 = int_to_ptr.vmem [resolvable:$true] %s1212
          %1218 = dma.vmem_to_hbm [thread:$0]  %s1213, 2048, %s1211, %s1191, 128, 128, 8
        $region32: #{tpu_custom_call.1} parent=27 // pred_fallthru
          _
        // Predicated region
        $region33: #{tpu_custom_call.1} parent=27 // pred_check
          %p1219 = pneg %p144
        $region34: #{tpu_custom_call.1} parent=27 // pred_check_branch
          %1221 = sbr.rel (%p1219) target = $region36
        $region35: #{tpu_custom_call.1} parent=27 // pred_region
          %s1223 = ssub.s32 32, 32
          %1224 = vsyncadd %s1196, %s1223
          %s1225 = sadd.s32 %s27, %s28
          %s1226 = smul.addr %s26, 2
          %s1227 = sadd.s32 %s1225, %s1226
          %s1228 = smul.addr %s1227, 32
          %s1229 = scalar_lea.hbm %s3, %s1228
          %s1231 = sshll.u32 %s1199, 4
          %s1232 = int_to_ptr.vmem [resolvable:$true] %s1231
          %1234 = dma.vmem_to_hbm [thread:$0]  %s1232, 32, %s1229, %s1196
        $region36: #{tpu_custom_call.1} parent=27 // pred_fallthru
          _
      $region28: #{tpu_custom_call.1} parent=5 // pred_fallthru
        _
      %p1235 = scmp.le.s32.totalorder 2, %s16
      // Predicated region
      $region37: #{tpu_custom_call.1} parent=5 // pred_check
        %p1236 = pneg %p1235
      $region38: #{tpu_custom_call.1} parent=5 // pred_check_branch
        %1238 = sbr.rel (%p1236) target = $region40
      $region39: #{tpu_custom_call.1} parent=5 // pred_region
        %s1239 = ssub.s32 %s16, 2
        // Predicated region
        $region41: #{tpu_custom_call.1} parent=39 // pred_check
          %p1240 = pneg %p120
        $region42: #{tpu_custom_call.1} parent=39 // pred_check_branch
          %1242 = sbr.rel (%p1240) target = $region44
        $region43: #{tpu_custom_call.1} parent=39 // pred_region
          %s1243 = sand.u32 %s105, 1
          %s1244 = scalar_lea.sflag [#allocation3], %s1243
          %s1245 = sand.u32 %s105, 1
          %s1246 = smul.addr %s1245, 128
          %s1247 = scalar_lea.vmem [#allocation2], %s1246
          %1248 = dma.done %s1244, 2048
        $region44: #{tpu_custom_call.1} parent=39 // pred_fallthru
          _
        // Predicated region
        $region45: #{tpu_custom_call.1} parent=39 // pred_check
          %p1249 = pneg %p150
        $region46: #{tpu_custom_call.1} parent=39 // pred_check_branch
          %1251 = sbr.rel (%p1249) target = $region48
        $region47: #{tpu_custom_call.1} parent=39 // pred_region
          %s1252 = sand.u32 %s135, 1
          %s1253 = scalar_lea.sflag [#allocation5], %s1252
          %s1254 = sand.u32 %s135, 1
          %s1255 = smul.addr %s1254, 2
          %s1256 = scalar_lea.vmem [#allocation4], %s1255
          %1257 = dma.done %s1253, 32
        $region48: #{tpu_custom_call.1} parent=39 // pred_fallthru
          _
      $region40: #{tpu_custom_call.1} parent=5 // pred_fallthru
        _
    $region6: #{tpu_custom_call.1} parent=1 // loop_footer
      %s20 = sadd.s32 1, %s16
    $region7: #{tpu_custom_call.1} parent=1 // loop_footer_branch
      %15 = sbr.rel target = $region3
    $region8: #{tpu_custom_call.1} parent=1 // loop_exit
      _
    %1258 = vsyncpa [#allocation3], 1
    %s1259 = scalar_lea.sflag [#allocation3], 1
    %1260 = vsyncpa %s1259, 1
    %1261 = vsyncpa [#allocation5], 1
    %s1262 = scalar_lea.sflag [#allocation5], 1
    %1263 = vsyncpa %s1262, 1

</llo_original>
